<compile_context>
chip_gen: v7x
topology: tpu7x:2x2x1
jax: 0.10.0
libtpu: 0.0.40
codegen_flags: <defaults>
</compile_context>

<pallas_src>
import functools
import inspect
import math
from functools import partial

import jax
import jax.numpy as jnp
from jax.experimental import pallas as pl
from jax.experimental.pallas import tpu as pltpu


# ---------------------------------------------------------------------------
# helpers
# ---------------------------------------------------------------------------
def _layernorm_f32(x, gamma, beta, eps=1e-5):
    """LayerNorm with statistics in f32 (returns f32)."""
    xf = x.astype(jnp.float32)
    mean = jnp.mean(xf, axis=-1, keepdims=True)
    var = jnp.mean(jnp.square(xf - mean), axis=-1, keepdims=True)
    return (xf - mean) * jax.lax.rsqrt(var + eps) * gamma + beta


def _gelu_exact(x):
    # matches torch.nn.functional.gelu default (erf based)
    # TODO(synk): on v5e a tanh-approx GELU would hit the (idle) EUP slot instead
    # of a VPU polynomial, if numerics allow.
    return 0.5 * x * (1.0 + jax.lax.erf(x * (1.0 / math.sqrt(2.0))))


def _choose_tile(n, dtype, target=256, cap=2048):
    """Largest sublane-aligned divisor of n that is <= target (dtype-aware)."""
    step = 16 if jnp.dtype(dtype).itemsize < 4 else 8
    if n <= target:
        return n
    t = (target // step) * step
    while t >= step:
        if n % t == 0:
            return t
        t -= step
    # no aligned divisor <= target: search upward (bounded) before giving up.
    t = ((target // step) + 1) * step
    while t <= min(n, cap):
        if n % t == 0:
            return t
        t += step
    if n <= cap:
        return n
    raise ValueError(
        f"sequence length {n} has no tile divisor that is a multiple of {step} "
        f"and <= {cap}; pad the sequence to a friendlier length.")


@functools.lru_cache(maxsize=None)
def _vmem_limit_bytes():
    """Generation-aware VMEM request: ~75% of physical, capped at 112 MiB."""
    cap = 128 * 1024 * 1024
    try:
        info = pltpu.get_tpu_info()
        cap = int(getattr(info, "vmem_capacity_bytes", cap))
    except Exception:
        pass
    return int(max(32 * 1024 * 1024, min(cap * 3 // 4, 112 * 1024 * 1024)))


@functools.lru_cache(maxsize=None)
def _single_buffer_ok():
    """Probe whether pl.Buffered(1) (single-buffered grid-invariant inputs) works."""
    try:
        if "pipeline_mode" not in inspect.signature(pl.BlockSpec).parameters:
            return False

        def _probe(x_ref, o_ref):
            o_ref[...] = x_ref[...] + 1.0

        fn = pl.pallas_call(
            _probe,
            out_shape=jax.ShapeDtypeStruct((16, 128), jnp.float32),
            grid=(2,),
            in_specs=[pl.BlockSpec((8, 128), lambda i: (0, 0),
                                   pipeline_mode=pl.Buffered(1))],
            out_specs=pl.BlockSpec((8, 128), lambda i: (i, 0)),
        )
        jax.block_until_ready(fn(jnp.zeros((8, 128), jnp.float32)))
        return True
    except Exception:
        return False


def _const_spec(shape, index_map):
    """BlockSpec for grid-invariant (weight) inputs: single-buffered if supported."""
    if _single_buffer_ok():
        return pl.BlockSpec(shape, index_map, pipeline_mode=pl.Buffered(1))
    return pl.BlockSpec(shape, index_map)


def _cost(flops, transcendentals, bytes_accessed):
    return pl.CostEstimate(flops=int(flops), transcendentals=int(transcendentals),
                           bytes_accessed=int(bytes_accessed))


# ---------------------------------------------------------------------------
# parameter preparation (done once, outside the per-step forward)
# ---------------------------------------------------------------------------
def prepare_params(params, heads, d_head, compute_dtype):
    """Cast weights to the compute dtype, fold the attention scale into Wq and
    split the GEGLU projection into value/gate halves."""
    scale = d_head ** (-0.5)

    def prep_attn(t):
        gamma, beta, wq, wk, wv, wo, bo = t
        assert wq.shape[1] == heads * d_head
        return dict(
            gamma=gamma.astype(jnp.float32), beta=beta.astype(jnp.float32),
            wq=(wq * scale).astype(compute_dtype),
            wk=wk.astype(compute_dtype), wv=wv.astype(compute_dtype),
            wo=wo.astype(compute_dtype), bo=bo.astype(jnp.float32))

    g3, b3, w1, b1, w2, bff = params["ff"]
    ffi = w2.shape[0]
    ff = dict(
        gamma=g3.astype(jnp.float32), beta=b3.astype(jnp.float32),
        wa=w1[:, :ffi].astype(compute_dtype), ba=b1[:, :ffi].astype(jnp.float32),
        wg=w1[:, ffi:].astype(compute_dtype), bg=b1[:, ffi:].astype(jnp.float32),
        w2=w2.astype(compute_dtype), b2=bff.astype(jnp.float32))

    return {"attn1": prep_attn(params["attn1"]),
            "attn2": prep_attn(params["attn2"]),
            "ff": ff}


# ---------------------------------------------------------------------------
# Kernel 1: attn1 pre-pass  — LN1(x) -> Q (scale folded in Wq), K, V
# grid = (B, N // tn)
# ---------------------------------------------------------------------------
def _ln_qkv_kernel(x_ref, g_ref, b_ref, wq_ref, wk_ref, wv_ref,
                   q_ref, k_ref, v_ref):
    x = x_ref[0]                                                 # (tn, dim)
    ln = _layernorm_f32(x, g_ref[...].astype(jnp.float32),
                        b_ref[...].astype(jnp.float32)).astype(x.dtype)
    q_ref[0] = jnp.dot(ln, wq_ref[...],
                       preferred_element_type=jnp.float32).astype(q_ref.dtype)
    k_ref[0] = jnp.dot(ln, wk_ref[...],
                       preferred_element_type=jnp.float32).astype(k_ref.dtype)
    v_ref[0] = jnp.dot(ln, wv_ref[...],
                       preferred_element_type=jnp.float32).astype(v_ref.dtype)


def _ln_qkv(x, p, tn):
    B, N, dim = x.shape
    inner = p["wq"].shape[1]
    shape = jax.ShapeDtypeStruct((B, N, inner), x.dtype)
    isz = x.dtype.itemsize
    return pl.pallas_call(
        _ln_qkv_kernel,
        out_shape=(shape, shape, shape),
        grid=(B, N // tn),
        in_specs=[
            pl.BlockSpec((1, tn, dim), lambda b, i: (b, i, 0)),
            _const_spec((1, dim), lambda b, i: (0, 0)),
            _const_spec((1, dim), lambda b, i: (0, 0)),
            _const_spec((dim, inner), lambda b, i: (0, 0)),
            _const_spec((dim, inner), lambda b, i: (0, 0)),
            _const_spec((dim, inner), lambda b, i: (0, 0)),
        ],
        out_specs=(pl.BlockSpec((1, tn, inner), lambda b, i: (b, i, 0)),) * 3,
        compiler_params=pltpu.CompilerParams(
            dimension_semantics=("parallel", "parallel"),
            vmem_limit_bytes=_vmem_limit_bytes()),
        cost_estimate=_cost(
            flops=6 * B * N * dim * inner,
            transcendentals=B * N,
            bytes_accessed=(B * N * (dim + 3 * inner) + 3 * dim * inner) * isz),
    )(x, p["gamma"], p["beta"], p["wq"], p["wk"], p["wv"])


# ---------------------------------------------------------------------------
# Kernel 2: flash attention core + output projection + residual
#   out = concat_h(softmax(Q_h K_h^T) V_h) @ Wo + bo + residual
# grid = (B, N // tn, Nk // tk); kv axis innermost, "arbitrary".
# Online-softmax state (m, l, acc) lives in VMEM scratch per (b, i).
# ---------------------------------------------------------------------------
def _flash_attn_kernel(q_ref, k_ref, v_ref, res_ref, wo_ref, bo_ref, out_ref,
                       m_scr, l_scr, acc_scr, *, heads, d_head):
    kv = pl.program_id(2)
    n_kv = pl.num_programs(2)

    @pl.when(kv == 0)
    def _init():
        m_scr[...] = jnp.full(m_scr.shape, -jnp.inf, dtype=m_scr.dtype)
        l_scr[...] = jnp.zeros(l_scr.shape, dtype=l_scr.dtype)
        acc_scr[...] = jnp.zeros(acc_scr.shape, dtype=acc_scr.dtype)

    q = q_ref[0]                                       # (tn, inner)  (Q pre-scaled)
    k = k_ref[0]                                       # (tk, inner)
    v = v_ref[0]                                       # (tk, inner)
    cdt = q.dtype

    for hh in range(heads):
        sl = slice(hh * d_head, (hh + 1) * d_head)
        s = jax.lax.dot_general(q[:, sl], k[:, sl], (((1,), (1,)), ((), ())),
                                preferred_element_type=jnp.float32)   # (tn, tk)
        m_prev = m_scr[hh]                                             # (tn, 1)
        m_new = jnp.maximum(m_prev, jnp.max(s, axis=-1, keepdims=True))
        alpha = jnp.exp(m_prev - m_new)
        p = jnp.exp(s - m_new)
        l_scr[hh] = alpha * l_scr[hh] + jnp.sum(p, axis=-1, keepdims=True)
        acc_scr[hh] = alpha * acc_scr[hh] + jnp.dot(
            p.astype(cdt), v[:, sl], preferred_element_type=jnp.float32)
        m_scr[hh] = m_new

    @pl.when(kv == n_kv - 1)
    def _finalize():
        out = res_ref[0].astype(jnp.float32) + bo_ref[...].astype(jnp.float32)
        for hh in range(heads):
            sl = slice(hh * d_head, (hh + 1) * d_head)
            # normalize AFTER the PV matmul (per-row reciprocal on (tn, d_head))
            o_h = (acc_scr[hh] *
                   pl.reciprocal(l_scr[hh], approx=True)).astype(cdt)
            out = out + jnp.dot(o_h, wo_ref[sl, :],
                                preferred_element_type=jnp.float32)
        out_ref[0] = out.astype(out_ref.dtype)


def _flash_attention(q, k, v, res, wo, bo, heads, d_head, tn, tk):
    B, N, inner = q.shape
    Nk = k.shape[1]
    dim = wo.shape[1]
    isz = q.dtype.itemsize
    return pl.pallas_call(
        partial(_flash_attn_kernel, heads=heads, d_head=d_head),
        out_shape=jax.ShapeDtypeStruct((B, N, dim), res.dtype),
        grid=(B, N // tn, Nk // tk),
        in_specs=[
            pl.BlockSpec((1, tn, inner), lambda b, i, kv: (b, i, 0)),   # Q tile
            pl.BlockSpec((1, tk, inner), lambda b, i, kv: (b, kv, 0)),  # K tile
            pl.BlockSpec((1, tk, inner), lambda b, i, kv: (b, kv, 0)),  # V tile
            pl.BlockSpec((1, tn, dim), lambda b, i, kv: (b, i, 0)),     # residual
            _const_spec((inner, dim), lambda b, i, kv: (0, 0)),         # Wo
            _const_spec((1, dim), lambda b, i, kv: (0, 0)),             # bo
        ],
        out_specs=pl.BlockSpec((1, tn, dim), lambda b, i, kv: (b, i, 0)),
        scratch_shapes=[
            pltpu.VMEM((heads, tn, 1), jnp.float32),        # running max m
            pltpu.VMEM((heads, tn, 1), jnp.float32),        # running sum l
            pltpu.VMEM((heads, tn, d_head), jnp.float32),   # running PV acc
        ],
        compiler_params=pltpu.CompilerParams(
            dimension_semantics=("parallel", "parallel", "arbitrary"),
            vmem_limit_bytes=_vmem_limit_bytes()),
        cost_estimate=_cost(
            flops=4 * B * N * Nk * inner + 2 * B * N * inner * dim,
            transcendentals=B * heads * N * Nk,
            bytes_accessed=(B * N * (inner + 2 * dim)
                            + 2 * B * Nk * inner * (N // tn)) * isz),
    )(q, k, v, res, wo, bo)


# ---------------------------------------------------------------------------
# Kernel 3: attn2 context K/V projection (once per batch element)
# grid = (B,)
# ---------------------------------------------------------------------------
def _ctx_kv_kernel(ctx_ref, wk_ref, wv_ref, k_ref, v_ref):
    c = ctx_ref[0].astype(wk_ref.dtype)                  # (M, cdim)
    k_ref[0] = jnp.dot(c, wk_ref[...],
                       preferred_element_type=jnp.float32).astype(k_ref.dtype)
    v_ref[0] = jnp.dot(c, wv_ref[...],
                       preferred_element_type=jnp.float32).astype(v_ref.dtype)


def _ctx_kv(context, wk, wv):
    B, M, cdim = context.shape
    inner = wk.shape[1]
    shape = jax.ShapeDtypeStruct((B, M, inner), wk.dtype)
    isz = wk.dtype.itemsize
    return pl.pallas_call(
        _ctx_kv_kernel,
        out_shape=(shape, shape),
        grid=(B,),
        in_specs=[
            pl.BlockSpec((1, M, cdim), lambda b: (b, 0, 0)),
            _const_spec((cdim, inner), lambda b: (0, 0)),
            _const_spec((cdim, inner), lambda b: (0, 0)),
        ],
        out_specs=(pl.BlockSpec((1, M, inner), lambda b: (b, 0, 0)),) * 2,
        compiler_params=pltpu.CompilerParams(
            dimension_semantics=("parallel",),
            vmem_limit_bytes=_vmem_limit_bytes()),
        cost_estimate=_cost(
            flops=4 * B * M * cdim * inner,
            transcendentals=0,
            bytes_accessed=(B * M * (cdim + 2 * inner) + 2 * cdim * inner) * isz),
    )(context, wk, wv)


# ---------------------------------------------------------------------------
# Kernel 4: fused attn2 + FF
#   h   = CrossAttn(LN2(x), context) + x     (context K/V precomputed)
#   out = Linear(GEGLU(LN3(h))) + h
# grid = (B, N // tn).  Context length M is small (e.g. 77), so no KV tiling here.
# ---------------------------------------------------------------------------
def _cross_attn_ff_kernel(x_ref, k_ref, v_ref,
                          g2_ref, b2_ref, wq_ref, wo_ref, bo_ref,
                          g3_ref, b3_ref,
                          wa_ref, ba_ref, wg_ref, bg_ref, w2_ref, bff_ref,
                          out_ref, *, heads, d_head):
    x = x_ref[0]                                          # (tn, dim)
    cdt = x.dtype

    # ---- attn2: LN2 -> Q; per-head attention against precomputed K/V ----
    ln2 = _layernorm_f32(x, g2_ref[...].astype(jnp.float32),
                         b2_ref[...].astype(jnp.float32)).astype(cdt)
    q = jnp.dot(ln2, wq_ref[...],
                preferred_element_type=jnp.float32).astype(cdt)  # (tn, inner), scaled
    k = k_ref[0]                                          # (M, inner)
    v = v_ref[0]                                          # (M, inner)

    h_res = x.astype(jnp.float32) + bo_ref[...].astype(jnp.float32)
    for hh in range(heads):
        sl = slice(hh * d_head, (hh + 1) * d_head)
        s = jax.lax.dot_general(q[:, sl], k[:, sl], (((1,), (1,)), ((), ())),
                                preferred_element_type=jnp.float32)   # (tn, M)
        s = s - jnp.max(s, axis=-1, keepdims=True)
        p = jnp.exp(s)
        o = jnp.dot(p.astype(cdt), v[:, sl],
                    preferred_element_type=jnp.float32)               # (tn, dh)
        # normalize AFTER the PV matmul
        o = o * pl.reciprocal(jnp.sum(p, axis=-1, keepdims=True), approx=True)
        h_res = h_res + jnp.dot(o.astype(cdt), wo_ref[sl, :],
                                preferred_element_type=jnp.float32)
    # h_res = attn2(LN2(x), ctx) + x                       (tn, dim) f32

    # ---- ff: LN3 -> GEGLU (split value/gate matmuls) -> Linear -> + residual ----
    ln3 = _layernorm_f32(h_res, g3_ref[...].astype(jnp.float32),
                         b3_ref[...].astype(jnp.float32)).astype(cdt)
    a = jnp.dot(ln3, wa_ref[...], preferred_element_type=jnp.float32) \
        + ba_ref[...].astype(jnp.float32)
    g = jnp.dot(ln3, wg_ref[...], preferred_element_type=jnp.float32) \
        + bg_ref[...].astype(jnp.float32)
    hidden = (a * _gelu_exact(g)).astype(cdt)
    out = jnp.dot(hidden, w2_ref[...], preferred_element_type=jnp.float32) \
        + bff_ref[...].astype(jnp.float32) + h_res
    out_ref[0] = out.astype(out_ref.dtype)


def _cross_attn_ff(x, k2, v2, p2, pff, heads, d_head, tn):
    B, N, dim = x.shape
    _, M, inner = k2.shape
    ffi = pff["wa"].shape[1]
    isz = x.dtype.itemsize
    # TODO(synk): on v7x at dim>=1280 stream the FF weights (ffi grid axis) or
    # split the FF into its own pallas_call; resident weights are too large there.
    return pl.pallas_call(
        partial(_cross_attn_ff_kernel, heads=heads, d_head=d_head),
        out_shape=jax.ShapeDtypeStruct((B, N, dim), x.dtype),
        grid=(B, N // tn),
        in_specs=[
            pl.BlockSpec((1, tn, dim), lambda b, i: (b, i, 0)),    # x tile
            pl.BlockSpec((1, M, inner), lambda b, i: (b, 0, 0)),   # K2 (per batch)
            pl.BlockSpec((1, M, inner), lambda b, i: (b, 0, 0)),   # V2 (per batch)
            _const_spec((1, dim), lambda b, i: (0, 0)),            # gamma2
            _const_spec((1, dim), lambda b, i: (0, 0)),            # beta2
            _const_spec((dim, inner), lambda b, i: (0, 0)),        # Wq2 (scaled)
            _const_spec((inner, dim), lambda b, i: (0, 0)),        # Wo2
            _const_spec((1, dim), lambda b, i: (0, 0)),            # bo2
            _const_spec((1, dim), lambda b, i: (0, 0)),            # gamma3
            _const_spec((1, dim), lambda b, i: (0, 0)),            # beta3
            _const_spec((dim, ffi), lambda b, i: (0, 0)),          # W_a (GEGLU value)
            _const_spec((1, ffi), lambda b, i: (0, 0)),            # b_a
            _const_spec((dim, ffi), lambda b, i: (0, 0)),          # W_g (GEGLU gate)
            _const_spec((1, ffi), lambda b, i: (0, 0)),            # b_g
            _const_spec((ffi, dim), lambda b, i: (0, 0)),          # W2
            _const_spec((1, dim), lambda b, i: (0, 0)),            # b2
        ],
        out_specs=pl.BlockSpec((1, tn, dim), lambda b, i: (b, i, 0)),
        compiler_params=pltpu.CompilerParams(
            dimension_semantics=("parallel", "parallel"),
            vmem_limit_bytes=_vmem_limit_bytes()),
        cost_estimate=_cost(
            flops=(2 * B * N * dim * inner + 4 * B * N * M * inner
                   + 2 * B * N * inner * dim + 6 * B * N * dim * ffi),
            transcendentals=B * N * (heads * M + ffi),
            bytes_accessed=(B * N * 2 * dim + 2 * B * M * inner
                            + 2 * dim * inner + 3 * dim * ffi) * isz),
    )(x, k2, v2, p2["gamma"], p2["beta"], p2["wq"], p2["wo"], p2["bo"],
      pff["gamma"], pff["beta"], pff["wa"], pff["ba"], pff["wg"], pff["bg"],
      pff["w2"], pff["b2"])


# ---------------------------------------------------------------------------
# BasicTransformerBlock forward (default adp_config=None path):
#   x = attn1(norm1(x)) + x        (self-attention: context = norm1(x))
#   x = attn2(norm2(x), context) + x
#   x = ff(norm3(x)) + x           (gated_ff=True -> GEGLU)
# ---------------------------------------------------------------------------
def basic_transformer_block(x, context, prepared, heads, d_head,
                            tile_q=None, tile_kv=None):
    B, N, dim = x.shape
    tn = _choose_tile(N, x.dtype, target=256) if tile_q is None else tile_q
    tk = _choose_tile(N, x.dtype, target=512) if tile_kv is None else tile_kv
    assert N % tn == 0 and N % tk == 0, "tile sizes must divide the sequence length"

    p1 = prepared["attn1"]
    assert p1["wo"].shape[0] == heads * d_head

    # attn1: LN1 + Q/K/V projection once per row, then flash attention.
    q1, k1, v1 = _ln_qkv(x, p1, tn)
    x1 = _flash_attention(q1, k1, v1, x, p1["wo"], p1["bo"], heads, d_head, tn, tk)

    # attn2 + FF (fused): context K/V precomputed once per batch element.
    p2 = prepared["attn2"]
    k2, v2 = _ctx_kv(context, p2["wk"], p2["wv"])
    return _cross_attn_ff(x1, k2, v2, p2, prepared["ff"], heads, d_head, tn)


# ---------------------------------------------------------------------------
# pure-JAX reference (sanity check)
# ---------------------------------------------------------------------------
def _ref_cross_attention(xq, ctx, wq, wk, wv, wo, bo, heads, d_head):
    q = xq @ wq
    k = ctx @ wk
    v = ctx @ wv
    B, N, _ = q.shape
    M = k.shape[1]
    q = q.reshape(B, N, heads, d_head).transpose(0, 2, 1, 3)
    k = k.reshape(B, M, heads, d_head).transpose(0, 2, 1, 3)
    v = v.reshape(B, M, heads, d_head).transpose(0, 2, 1, 3)
    sim = jnp.einsum("bhid,bhjd->bhij", q, k) * (d_head ** -0.5)
    p = jax.nn.softmax(sim, axis=-1)
    o = jnp.einsum("bhij,bhjd->bhid", p, v)
    o = o.transpose(0, 2, 1, 3).reshape(B, N, heads * d_head)
    return o @ wo + bo


def _ref_block(x, context, params, heads, d_head):
    g1, b1, wq1, wk1, wv1, wo1, bo1 = params["attn1"]
    ln1 = _layernorm_f32(x, g1, b1)
    x = _ref_cross_attention(ln1, ln1, wq1, wk1, wv1, wo1, bo1, heads, d_head) + x

    g2, b2, wq2, wk2, wv2, wo2, bo2 = params["attn2"]
    ln2 = _layernorm_f32(x, g2, b2)
    x = _ref_cross_attention(ln2, context, wq2, wk2, wv2, wo2, bo2, heads, d_head) + x

    g3, b3, w1, bb1, w2, bb2 = params["ff"]
    ffi = w2.shape[0]
    ln3 = _layernorm_f32(x, g3, b3)
    proj = ln3 @ w1 + bb1
    a, gate = proj[..., :ffi], proj[..., ffi:]
    return (a * _gelu_exact(gate)) @ w2 + bb2 + x


# ---------------------------------------------------------------------------
if __name__ == "__main__":
    key = jax.random.PRNGKey(0)

    # small shapes consistent with the module's forward
    B, N, M = 2, 8, 8
    dim = 32
    n_heads, d_head = 4, 8            # inner_dim = 32
    context_dim = 16
    ff_inner = dim * 4                # 128

    ks = jax.random.split(key, 16)
    s = 0.05

    def nrm(k, shape):
        return (s * jax.random.normal(k, shape)).astype(jnp.float32)

    def make_attn_params(k0, k1, k2, k3, k4, cdim):
        inner = n_heads * d_head
        return (
            jnp.ones((1, dim), jnp.float32),   # norm gamma
            jnp.zeros((1, dim), jnp.float32),  # norm beta
            nrm(k0, (dim, inner)),             # Wq
            nrm(k1, (cdim, inner)),            # Wk
            nrm(k2, (cdim, inner)),            # Wv
            nrm(k3, (inner, dim)),             # Wo
            nrm(k4, (1, dim)),                 # bo
        )

    params = {
        "attn1": make_attn_params(ks[0], ks[1], ks[2], ks[3], ks[4], dim),
        "attn2": make_attn_params(ks[5], ks[6], ks[7], ks[8], ks[9], context_dim),
        "ff": (
            jnp.ones((1, dim), jnp.float32),   # norm3 gamma
            jnp.zeros((1, dim), jnp.float32),  # norm3 beta
            nrm(ks[10], (dim, 2 * ff_inner)),  # GEGLU proj weight
            nrm(ks[11], (1, 2 * ff_inner)),    # GEGLU proj bias
            nrm(ks[12], (ff_inner, dim)),      # out linear weight
            nrm(ks[13], (1, dim)),             # out linear bias
        ),
    }

    x = jax.random.normal(ks[14], (B, N, dim), jnp.float32)
    context = jax.random.normal(ks[15], (B, M, context_dim), jnp.float32)

    prepared = prepare_params(params, n_heads, d_head, compute_dtype=x.dtype)
    out = basic_transformer_block(x, context, prepared, n_heads, d_head)
    out = jax.block_until_ready(out)

    ref = _ref_block(x, context, params, n_heads, d_head)
    assert out.shape == (B, N, dim)
    assert jnp.allclose(out, ref, atol=1e-3, rtol=1e-3), "mismatch vs JAX reference"

    print("KERNEL_OK")
</pallas_src>

<mosaic_0001>
module attributes {stable_mosaic.version = 11 : i64} {
  func.func @_probe(%arg0: i32, %arg1: memref<8x128xf32, #tpu.memory_space<vmem>>, %arg2: memref<8x128xf32, #tpu.memory_space<vmem>>) attributes {dimension_semantics = [#tpu.dimension_semantics<arbitrary>], iteration_bounds = array<i64: 2>, scalar_prefetch = 0 : i64, scratch_operands = 0 : i64, tpu.core_type = #tpu.core_type<tc>, window_params = [{pipeline_mode = #tpu.pipeline_mode<synchronous>, transform_indices = @transform_0, window_bounds = array<i64: 8, 128>}, {transform_indices = @transform_1, window_bounds = array<i64: 8, 128>}]} {
    %c0 = arith.constant 0 : index
    %c0_0 = arith.constant 0 : index
    %0 = vector.load %arg1[%c0, %c0_0] : memref<8x128xf32, #tpu.memory_space<vmem>>, vector<8x128xf32>
    %cst = arith.constant 1.000000e+00 : f32
    %1 = vector.broadcast %cst : f32 to vector<8x128xf32>
    %2 = arith.addf %0, %1 : vector<8x128xf32>
    %c0_1 = arith.constant 0 : index
    %c0_2 = arith.constant 0 : index
    %3 = vector.load %arg2[%c0_1, %c0_2] : memref<8x128xf32, #tpu.memory_space<vmem>>, vector<8x128xf32>
    tpu.vector_store %arg2[%c0_1, %c0_2], %2 {strides = array<i32>} : memref<8x128xf32, #tpu.memory_space<vmem>>, vector<8x128xf32>,
    return
  }
  func.func @transform_0(%arg0: i32) -> (i32, i32) {
    %c0_i32 = arith.constant 0 : i32
    %c0_i32_0 = arith.constant 0 : i32
    %c0_i32_1 = arith.constant 0 : i32
    return %c0_i32, %c0_i32_0 : i32, i32
  }
  func.func @transform_1(%arg0: i32) -> (i32, i32) {
    %c0_i32 = arith.constant 0 : i32
    %c0_i32_0 = arith.constant 0 : i32
    return %arg0, %c0_i32 : i32, i32
  }
}

module attributes {stable_mosaic.version = 11 : i64} {
  func.func @_ln_qkv_kernel(%arg0: i32, %arg1: i32, %arg2: memref<1x8x32xf32, #tpu.memory_space<vmem>>, %arg3: memref<1x32xf32, #tpu.memory_space<vmem>>, %arg4: memref<1x32xf32, #tpu.memory_space<vmem>>, %arg5: memref<32x32xf32, #tpu.memory_space<vmem>>, %arg6: memref<32x32xf32, #tpu.memory_space<vmem>>, %arg7: memref<32x32xf32, #tpu.memory_space<vmem>>, %arg8: memref<1x8x32xf32, #tpu.memory_space<vmem>>, %arg9: memref<1x8x32xf32, #tpu.memory_space<vmem>>, %arg10: memref<1x8x32xf32, #tpu.memory_space<vmem>>) attributes {dimension_semantics = [#tpu.dimension_semantics<parallel>, #tpu.dimension_semantics<parallel>], iteration_bounds = array<i64: 2, 1>, scalar_prefetch = 0 : i64, scratch_operands = 0 : i64, tpu.core_type = #tpu.core_type<tc>, window_params = [{transform_indices = @transform_0, window_bounds = array<i64: 1, 8, 32>}, {pipeline_mode = #tpu.pipeline_mode<synchronous>, transform_indices = @transform_1, window_bounds = array<i64: 1, 32>}, {pipeline_mode = #tpu.pipeline_mode<synchronous>, transform_indices = @transform_2, window_bounds = array<i64: 1, 32>}, {pipeline_mode = #tpu.pipeline_mode<synchronous>, transform_indices = @transform_3, window_bounds = array<i64: 32, 32>}, {pipeline_mode = #tpu.pipeline_mode<synchronous>, transform_indices = @transform_4, window_bounds = array<i64: 32, 32>}, {pipeline_mode = #tpu.pipeline_mode<synchronous>, transform_indices = @transform_5, window_bounds = array<i64: 32, 32>}, {transform_indices = @transform_6, window_bounds = array<i64: 1, 8, 32>}, {transform_indices = @transform_7, window_bounds = array<i64: 1, 8, 32>}, {transform_indices = @transform_8, window_bounds = array<i64: 1, 8, 32>}]} {
    %c0 = arith.constant 0 : index
    %c0_0 = arith.constant 0 : index
    %c0_1 = arith.constant 0 : index
    %0 = vector.load %arg2[%c0, %c0_0, %c0_1] : memref<1x8x32xf32, #tpu.memory_space<vmem>>, vector<1x8x32xf32>
    %1 = vector.shape_cast %0 : vector<1x8x32xf32> to vector<8x32xf32>
    %c0_2 = arith.constant 0 : index
    %c0_3 = arith.constant 0 : index
    %2 = vector.load %arg3[%c0_2, %c0_3] : memref<1x32xf32, #tpu.memory_space<vmem>>, vector<1x32xf32>
    %c0_4 = arith.constant 0 : index
    %c0_5 = arith.constant 0 : index
    %3 = vector.load %arg4[%c0_4, %c0_5] : memref<1x32xf32, #tpu.memory_space<vmem>>, vector<1x32xf32>
    %cst = arith.constant dense<0.000000e+00> : vector<8xf32>
    %4 = vector.multi_reduction <add>, %1, %cst [1] : vector<8x32xf32> to vector<8xf32>
    %5 = vector.shape_cast %4 : vector<8xf32> to vector<8x1xf32>
    %cst_6 = arith.constant 3.200000e+01 : f32
    %6 = vector.broadcast %cst_6 : f32 to vector<8x1xf32>
    %7 = arith.divf %5, %6 : vector<8x1xf32>
    %8 = vector.broadcast %7 : vector<8x1xf32> to vector<8x32xf32>
    %9 = arith.subf %1, %8 : vector<8x32xf32>
    %10 = arith.mulf %9, %9 : vector<8x32xf32>
    %cst_7 = arith.constant dense<0.000000e+00> : vector<8xf32>
    %11 = vector.multi_reduction <add>, %10, %cst_7 [1] : vector<8x32xf32> to vector<8xf32>
    %12 = vector.shape_cast %11 : vector<8xf32> to vector<8x1xf32>
    %cst_8 = arith.constant 3.200000e+01 : f32
    %13 = vector.broadcast %cst_8 : f32 to vector<8x1xf32>
    %14 = arith.divf %12, %13 : vector<8x1xf32>
    %15 = vector.broadcast %7 : vector<8x1xf32> to vector<8x32xf32>
    %16 = arith.subf %1, %15 : vector<8x32xf32>
    %cst_9 = arith.constant 9.99999974E-6 : f32
    %17 = vector.broadcast %cst_9 : f32 to vector<8x1xf32>
    %18 = arith.addf %14, %17 : vector<8x1xf32>
    %19 = math.rsqrt %18 : vector<8x1xf32>
    %20 = vector.broadcast %19 : vector<8x1xf32> to vector<8x32xf32>
    %21 = arith.mulf %16, %20 : vector<8x32xf32>
    %22 = vector.broadcast %2 : vector<1x32xf32> to vector<8x32xf32>
    %23 = arith.mulf %21, %22 : vector<8x32xf32>
    %24 = vector.broadcast %3 : vector<1x32xf32> to vector<8x32xf32>
    %25 = arith.addf %23, %24 : vector<8x32xf32>
    %c0_10 = arith.constant 0 : index
    %c0_11 = arith.constant 0 : index
    %26 = vector.load %arg5[%c0_10, %c0_11] : memref<32x32xf32, #tpu.memory_space<vmem>>, vector<32x32xf32>
    %cst_12 = arith.constant dense<0.000000e+00> : vector<8x32xf32>
    %27 = tpu.matmul %25, %26, %cst_12 {dimension_numbers = #tpu.dot_dimension_numbers<[1], [0], [0], [1], [0, 0, 1, 1], [], []>} : vector<8x32xf32>, vector<32x32xf32>, vector<8x32xf32> -> vector<8x32xf32>
    %c0_13 = arith.constant 0 : index
    %c0_14 = arith.constant 0 : index
    %c0_15 = arith.constant 0 : index
    %28 = vector.load %arg8[%c0_13, %c0_14, %c0_15] : memref<1x8x32xf32, #tpu.memory_space<vmem>>, vector<1x8x32xf32>
    %29 = vector.shape_cast %28 : vector<1x8x32xf32> to vector<8x32xf32>
    %30 = vector.shape_cast %27 : vector<8x32xf32> to vector<1x8x32xf32>
    tpu.vector_store %arg8[%c0_13, %c0_14, %c0_15], %30 {strides = array<i32>} : memref<1x8x32xf32, #tpu.memory_space<vmem>>, vector<1x8x32xf32>,
    %c0_16 = arith.constant 0 : index
    %c0_17 = arith.constant 0 : index
    %31 = vector.load %arg6[%c0_16, %c0_17] : memref<32x32xf32, #tpu.memory_space<vmem>>, vector<32x32xf32>
    %cst_18 = arith.constant dense<0.000000e+00> : vector<8x32xf32>
    %32 = tpu.matmul %25, %31, %cst_18 {dimension_numbers = #tpu.dot_dimension_numbers<[1], [0], [0], [1], [0, 0, 1, 1], [], []>} : vector<8x32xf32>, vector<32x32xf32>, vector<8x32xf32> -> vector<8x32xf32>
    %c0_19 = arith.constant 0 : index
    %c0_20 = arith.constant 0 : index
    %c0_21 = arith.constant 0 : index
    %33 = vector.load %arg9[%c0_19, %c0_20, %c0_21] : memref<1x8x32xf32, #tpu.memory_space<vmem>>, vector<1x8x32xf32>
    %34 = vector.shape_cast %33 : vector<1x8x32xf32> to vector<8x32xf32>
    %35 = vector.shape_cast %32 : vector<8x32xf32> to vector<1x8x32xf32>
    tpu.vector_store %arg9[%c0_19, %c0_20, %c0_21], %35 {strides = array<i32>} : memref<1x8x32xf32, #tpu.memory_space<vmem>>, vector<1x8x32xf32>,
    %c0_22 = arith.constant 0 : index
    %c0_23 = arith.constant 0 : index
    %36 = vector.load %arg7[%c0_22, %c0_23] : memref<32x32xf32, #tpu.memory_space<vmem>>, vector<32x32xf32>
    %cst_24 = arith.constant dense<0.000000e+00> : vector<8x32xf32>
    %37 = tpu.matmul %25, %36, %cst_24 {dimension_numbers = #tpu.dot_dimension_numbers<[1], [0], [0], [1], [0, 0, 1, 1], [], []>} : vector<8x32xf32>, vector<32x32xf32>, vector<8x32xf32> -> vector<8x32xf32>
    %c0_25 = arith.constant 0 : index
    %c0_26 = arith.constant 0 : index
    %c0_27 = arith.constant 0 : index
    %38 = vector.load %arg10[%c0_25, %c0_26, %c0_27] : memref<1x8x32xf32, #tpu.memory_space<vmem>>, vector<1x8x32xf32>
    %39 = vector.shape_cast %38 : vector<1x8x32xf32> to vector<8x32xf32>
    %40 = vector.shape_cast %37 : vector<8x32xf32> to vector<1x8x32xf32>
    tpu.vector_store %arg10[%c0_25, %c0_26, %c0_27], %40 {strides = array<i32>} : memref<1x8x32xf32, #tpu.memory_space<vmem>>, vector<1x8x32xf32>,
    return
  }
  func.func @transform_0(%arg0: i32, %arg1: i32) -> (i32, i32, i32) {
    %c0_i32 = arith.constant 0 : i32
    %c0_i32_0 = arith.constant 0 : i32
    return %arg0, %arg1, %c0_i32 : i32, i32, i32
  }
  func.func @transform_1(%arg0: i32, %arg1: i32) -> (i32, i32) {
    %c0_i32 = arith.constant 0 : i32
    %c0_i32_0 = arith.constant 0 : i32
    %c0_i32_1 = arith.constant 0 : i32
    return %c0_i32, %c0_i32_0 : i32, i32
  }
  func.func @transform_2(%arg0: i32, %arg1: i32) -> (i32, i32) {
    %c0_i32 = arith.constant 0 : i32
    %c0_i32_0 = arith.constant 0 : i32
    %c0_i32_1 = arith.constant 0 : i32
    return %c0_i32, %c0_i32_0 : i32, i32
  }
  func.func @transform_3(%arg0: i32, %arg1: i32) -> (i32, i32) {
    %c0_i32 = arith.constant 0 : i32
    %c0_i32_0 = arith.constant 0 : i32
    %c0_i32_1 = arith.constant 0 : i32
    return %c0_i32, %c0_i32_0 : i32, i32
  }
  func.func @transform_4(%arg0: i32, %arg1: i32) -> (i32, i32) {
    %c0_i32 = arith.constant 0 : i32
    %c0_i32_0 = arith.constant 0 : i32
    %c0_i32_1 = arith.constant 0 : i32
    return %c0_i32, %c0_i32_0 : i32, i32
  }
  func.func @transform_5(%arg0: i32, %arg1: i32) -> (i32, i32) {
    %c0_i32 = arith.constant 0 : i32
    %c0_i32_0 = arith.constant 0 : i32
    %c0_i32_1 = arith.constant 0 : i32
    return %c0_i32, %c0_i32_0 : i32, i32
  }
  func.func @transform_6(%arg0: i32, %arg1: i32) -> (i32, i32, i32) {
    %c0_i32 = arith.constant 0 : i32
    %c0_i32_0 = arith.constant 0 : i32
    return %arg0, %arg1, %c0_i32 : i32, i32, i32
  }
  func.func @transform_7(%arg0: i32, %arg1: i32) -> (i32, i32, i32) {
    %c0_i32 = arith.constant 0 : i32
    %c0_i32_0 = arith.constant 0 : i32
    return %arg0, %arg1, %c0_i32 : i32, i32, i32
  }
  func.func @transform_8(%arg0: i32, %arg1: i32) -> (i32, i32, i32) {
    %c0_i32 = arith.constant 0 : i32
    %c0_i32_0 = arith.constant 0 : i32
    return %arg0, %arg1, %c0_i32 : i32, i32, i32
  }
}

</mosaic_0001>

<llo_original>
// kernel: tpu_custom_call.1
$region0: #{tpu_custom_call.1}
  #allocation0 [shape = 'u32[]', space=smem, size = 0x4, offset = 0x4, fixed_abs, tag = 'smem constant byte address 0x4 - core index']
  #allocation1 [shape = 'u32[144,128]{1,0:T(1,128)}', space=vmem, size = 0x12000, scoped, tag = 'internal scratch']
  %s0 = inlined_call_operand.hbm [shape: f32[8,128], index: 0, kind: input, shape index: {}]
  %s1 = inlined_call_operand.hbm [shape: f32[16,128], index: 1, kind: output, shape index: {}]
  %s2 = sld [smem:[#allocation0]]
  $region41: #{tpu_custom_call.1} parent=0
    _
  %s4 = ssub.s32 1, %s2
  %s5 = scalar_select 0, %s4, %s2
  $region1: #{tpu_custom_call.1} parent=0
    #allocation2 [shape = 'u8[4096]{0}', space=vmem, size = 0x1000, scoped, tag = 'input window, operand 0, single buffered']
    #allocation3 [shape = 's32[2]{0}', space=sflag, size = 0x8, scoped, tag = 'scoped memory for tpu_custom_call.1']
    #allocation4 [shape = 's32[2]{0}', space=sflag, size = 0x8, scoped, tag = 'scoped memory for tpu_custom_call.1']
    #allocation5 [shape = 'u8[8192]{0}', space=vmem, size = 0x2000, scoped, tag = 'output window, operand 0']
    %6 = vsyncpa [#allocation3], 0
    %7 = vsyncpa [#allocation4], 0
    %s8 = scalar_lea.sflag [#allocation4], 1
    %9 = vsyncpa %s8, 0
    loop: start=0, step=1, limit=4
    $region2: #{tpu_custom_call.1} parent=1 // loop_pre_header
      _
    $region3: #{tpu_custom_call.1} parent=1 // loop_header
      %s11 = sphi 0, %s15
      %p12 = scmp.ge.s32.totalorder %s11, 4
      %s19 = sphi 0, %s19
      %s21 = sphi 0, %s19
      %s22 = sphi 0, %s21
      %s36 = sphi 0, %s22
      %s42 = sphi 0, %s44
      %s45 = sphi 0, %s42
      %s46 = sphi 0, %s45
      %s62 = sphi 0, %s46
    $region4: #{tpu_custom_call.1} parent=1 // loop_header_branch
      %14 = sbr.rel (%p12) target = $region8
    $region5: #{tpu_custom_call.1} parent=1 // loop_body
      %s16 = ssub.s32 %s11, 1
      %s17 = ssub.s32 %s11, 2
      %s18 = sadd.s32 %s11, 1
      %s20 = sadd.s32 %s19, 1
      %p23 = scmp.eq.s32.totalorder %s11, 1
      %p24 = scmp.ne.s32.totalorder %s19, %s21
      %p25 = scmp.eq.s32.totalorder %s11, 0
      %p26 = por %p24, %p25
      %p27 = scmp.ne.s32.totalorder %s19, %s21
      %p28 = scmp.eq.s32.totalorder %s16, 1
      %p29 = por %p27, %p28
      %p30 = scmp.ne.s32.totalorder %s21, %s22
      %p31 = scmp.eq.s32.totalorder %s16, 0
      %p32 = por %p30, %p31
      %p33 = scmp.ne.s32.totalorder %s21, %s22
      %p34 = scmp.eq.s32.totalorder %s17, 1
      %p35 = por %p33, %p34
      %p37 = scmp.ne.s32.totalorder %s22, %s36
      %p38 = scmp.eq.s32.totalorder %s17, 0
      %p39 = por %p37, %p38
      %s40 = ssub.s32 %s11, %s18
      %p41 = scmp.eq.s32.totalorder %s40, 0
      %s43 = sadd.s32 %s42, 1
      %s44 = scalar_select %p41, %s42, %s43
      %p47 = pneg %p41
      %p48 = scmp.eq.s32.totalorder %s11, 1
      %p49 = por %p47, %p48
      %p50 = scmp.ne.s32.totalorder %s42, %s45
      %p51 = scmp.eq.s32.totalorder %s11, 0
      %p52 = por %p50, %p51
      %p53 = scmp.ne.s32.totalorder %s42, %s45
      %p54 = scmp.eq.s32.totalorder %s16, 1
      %p55 = por %p53, %p54
      %p56 = scmp.ne.s32.totalorder %s45, %s46
      %p57 = scmp.eq.s32.totalorder %s16, 0
      %p58 = por %p56, %p57
      %p59 = scmp.ne.s32.totalorder %s45, %s46
      %p60 = scmp.eq.s32.totalorder %s17, 1
      %p61 = por %p59, %p60
      %p63 = scmp.ne.s32.totalorder %s46, %s62
      %p64 = scmp.eq.s32.totalorder %s17, 0
      %p65 = por %p63, %p64
      %p66 = scmp.le.s32.totalorder 1, %s11
      %p67 = scmp.lt.s32.totalorder %s11, 3
      %p68 = pnand %p66, %p67
      %p69 = pneg %p68
      // Predicated region
      $region9: #{tpu_custom_call.1} parent=5 // pred_check
        _
      $region10: #{tpu_custom_call.1} parent=5 // pred_check_branch
        %71 = sbr.rel (%p68) target = $region12
      $region11: #{tpu_custom_call.1} parent=5 // pred_region
        %s72 = ssub.s32 %s11, 1
        // Predicated region
        $region13: #{tpu_custom_call.1} parent=11 // pred_check
          %p73 = pneg %p32
        $region14: #{tpu_custom_call.1} parent=11 // pred_check_branch
          %75 = sbr.rel (%p73) target = $region16
        $region15: #{tpu_custom_call.1} parent=11 // pred_region
          %s77 = ssub.s32 128, 128
          %78 = vsyncadd [#allocation3], %s77
          %s80 = sshll.u32 [#allocation2], 4
          %s81 = int_to_ptr.vmem [resolvable:$true] %s80
          %83 = dma.hbm_to_vmem [thread:$0]  %s0, 128, %s81, [#allocation3]
        $region16: #{tpu_custom_call.1} parent=11 // pred_fallthru
          _
      $region12: #{tpu_custom_call.1} parent=5 // pred_fallthru
        _
      %p84 = scmp.lt.s32.totalorder %s11, 2
      // Predicated region
      $region17: #{tpu_custom_call.1} parent=5 // pred_check
        %p85 = pneg %p84
      $region18: #{tpu_custom_call.1} parent=5 // pred_check_branch
        %87 = sbr.rel (%p85) target = $region20
      $region19: #{tpu_custom_call.1} parent=5 // pred_region
        _
      $region20: #{tpu_custom_call.1} parent=5 // pred_fallthru
        _
      %p88 = scmp.le.s32.totalorder 1, %s11
      %p89 = scmp.lt.s32.totalorder %s11, 3
      %p90 = pnand %p88, %p89
      %p91 = pneg %p90
      // Predicated region
      $region21: #{tpu_custom_call.1} parent=5 // pred_check
        _
      $region22: #{tpu_custom_call.1} parent=5 // pred_check_branch
        %93 = sbr.rel (%p90) target = $region24
      $region23: #{tpu_custom_call.1} parent=5 // pred_region
        %s94 = ssub.s32 %s11, 1
        // Predicated region
        $region25: #{tpu_custom_call.1} parent=23 // pred_check
          %p95 = pneg %p32
        $region26: #{tpu_custom_call.1} parent=23 // pred_check_branch
          %97 = sbr.rel (%p95) target = $region28
        $region27: #{tpu_custom_call.1} parent=23 // pred_region
          %98 = dma.done [#allocation3], 128
        $region28: #{tpu_custom_call.1} parent=23 // pred_fallthru
          _
        %p99 = pneg %p32
        %p100 = pneg %p29
        %p101 = pneg %p58
        %p102 = pneg %p55
        %s103 = sand.u32 %s45, 1
        %s104 = scalar_lea.sflag [#allocation4], %s103
        %s105 = sand.u32 %s45, 1
        %s106 = smul.addr %s105, 8
        %s107 = scalar_lea.vmem [#allocation5], %s106
        %v108 = vld [vmem:[#allocation2] sm:$0xff]
        %v109 = vadd.f32 %v108, 1.0
        %110 = vst [vmem:[%s107] sm:$0xff] %v109
        %s111 = sand.u32 %s45, 1
        %s112 = scalar_lea.sflag [#allocation4], %s111
        %s113 = sand.u32 %s45, 1
        %s114 = smul.addr %s113, 8
        %s115 = scalar_lea.vmem [#allocation5], %s114
        // Predicated region
        $region29: #{tpu_custom_call.1} parent=23 // pred_check
          %p116 = pneg %p55
        $region30: #{tpu_custom_call.1} parent=23 // pred_check_branch
          %118 = sbr.rel (%p116) target = $region32
        $region31: #{tpu_custom_call.1} parent=23 // pred_region
          %s120 = ssub.s32 128, 128
          %121 = vsyncadd %s112, %s120
          %s122 = smul.addr %s16, 128
          %s123 = scalar_lea.hbm %s1, %s122
          %s125 = sshll.u32 %s115, 4
          %s126 = int_to_ptr.vmem [resolvable:$true] %s125
          %128 = dma.vmem_to_hbm [thread:$0]  %s126, 128, %s123, %s112
        $region32: #{tpu_custom_call.1} parent=23 // pred_fallthru
          _
      $region24: #{tpu_custom_call.1} parent=5 // pred_fallthru
        _
      %p129 = scmp.le.s32.totalorder 2, %s11
      // Predicated region
      $region33: #{tpu_custom_call.1} parent=5 // pred_check
        %p130 = pneg %p129
      $region34: #{tpu_custom_call.1} parent=5 // pred_check_branch
        %132 = sbr.rel (%p130) target = $region36
      $region35: #{tpu_custom_call.1} parent=5 // pred_region
        %s133 = ssub.s32 %s11, 2
        // Predicated region
        $region37: #{tpu_custom_call.1} parent=35 // pred_check
          %p134 = pneg %p61
        $region38: #{tpu_custom_call.1} parent=35 // pred_check_branch
          %136 = sbr.rel (%p134) target = $region40
        $region39: #{tpu_custom_call.1} parent=35 // pred_region
          %s137 = sand.u32 %s46, 1
          %s138 = scalar_lea.sflag [#allocation4], %s137
          %s139 = sand.u32 %s46, 1
          %s140 = smul.addr %s139, 8
          %s141 = scalar_lea.vmem [#allocation5], %s140
          %142 = dma.done %s138, 128
        $region40: #{tpu_custom_call.1} parent=35 // pred_fallthru
          _
      $region36: #{tpu_custom_call.1} parent=5 // pred_fallthru
        _
    $region6: #{tpu_custom_call.1} parent=1 // loop_footer
      %s15 = sadd.s32 1, %s11
    $region7: #{tpu_custom_call.1} parent=1 // loop_footer_branch
      %10 = sbr.rel target = $region3
    $region8: #{tpu_custom_call.1} parent=1 // loop_exit
      _
    %143 = vsyncpa [#allocation3], 1
    %s144 = scalar_lea.sflag [#allocation3], 1
    %145 = vsyncpa %s144, 1
    %146 = vsyncpa [#allocation4], 1
    %s147 = scalar_lea.sflag [#allocation4], 1
    %148 = vsyncpa %s147, 1

// kernel: tpu_custom_call.1
$region0: #{tpu_custom_call.1}
  #allocation0 [shape = 'u32[]', space=smem, size = 0x4, offset = 0x4, fixed_abs, tag = 'smem constant byte address 0x4 - core index']
  #allocation1 [shape = 'u32[144,128]{1,0:T(1,128)}', space=vmem, size = 0x12000, scoped, tag = 'internal scratch']
  %s0 = inlined_call_operand.hbm [shape: f32[2,8,32], index: 0, kind: input, shape index: {}]
  %s1 = inlined_call_operand.hbm [shape: f32[1,32], index: 1, kind: input, shape index: {}]
  %s2 = inlined_call_operand.hbm [shape: f32[1,32], index: 2, kind: input, shape index: {}]
  %s3 = inlined_call_operand.hbm [shape: f32[32,32], index: 3, kind: input, shape index: {}]
  %s4 = inlined_call_operand.hbm [shape: f32[32,32], index: 4, kind: input, shape index: {}]
  %s5 = inlined_call_operand.hbm [shape: f32[32,32], index: 5, kind: input, shape index: {}]
  %s6 = inlined_call_operand.hbm [shape: f32[2,8,32], index: 6, kind: output, shape index: {0}]
  %s7 = inlined_call_operand.hbm [shape: f32[2,8,32], index: 7, kind: output, shape index: {1}]
  %s8 = inlined_call_operand.hbm [shape: f32[2,8,32], index: 8, kind: output, shape index: {2}]
  %9 = xla_tuple %s6, %s7, %s8
  %s10 = sld [smem:[#allocation0]]
  $region97: #{tpu_custom_call.1} parent=0
    _
  %s12 = ssub.s32 1, %s10
  %s13 = scalar_select 0, %s12, %s10
  $region1: #{tpu_custom_call.1} parent=0
    #allocation2 [shape = 'u8[8192]{0}', space=vmem, size = 0x2000, scoped, tag = 'input window, operand 0']
    #allocation3 [shape = 's32[2]{0}', space=sflag, size = 0x8, scoped, tag = 'scoped memory for tpu_custom_call.1']
    #allocation4 [shape = 's32[2]{0}', space=sflag, size = 0x8, scoped, tag = 'scoped memory for tpu_custom_call.1']
    #allocation5 [shape = 'u8[512]{0}', space=vmem, size = 0x400, scoped, tag = 'input window, operand 1, single buffered']
    #allocation6 [shape = 's32[1]{0}', space=sflag, size = 0x4, scoped, tag = 'scoped memory for tpu_custom_call.1']
    #allocation7 [shape = 'u8[512]{0}', space=vmem, size = 0x400, scoped, tag = 'input window, operand 2, single buffered']
    #allocation8 [shape = 'u8[16384]{0}', space=vmem, size = 0x4000, scoped, tag = 'input window, operand 3, single buffered']
    #allocation9 [shape = 's32[1]{0}', space=sflag, size = 0x4, scoped, tag = 'scoped memory for tpu_custom_call.1']
    #allocation10 [shape = 'u8[16384]{0}', space=vmem, size = 0x4000, scoped, tag = 'input window, operand 4, single buffered']
    #allocation11 [shape = 'u8[16384]{0}', space=vmem, size = 0x4000, scoped, tag = 'input window, operand 5, single buffered']
    #allocation12 [shape = 's32[1]{0}', space=sflag, size = 0x4, scoped, tag = 'scoped memory for tpu_custom_call.1']
    #allocation13 [shape = 'u8[8192]{0}', space=vmem, size = 0x2000, scoped, tag = 'output window, operand 0']
    #allocation14 [shape = 'u8[8192]{0}', space=vmem, size = 0x2000, scoped, tag = 'output window, operand 1']
    #allocation15 [shape = 's32[2]{0}', space=sflag, size = 0x8, scoped, tag = 'scoped memory for tpu_custom_call.1']
    #allocation16 [shape = 'u8[8192]{0}', space=vmem, size = 0x2000, scoped, tag = 'output window, operand 2']
    %14 = vsyncpa [#allocation3], 0
    %s15 = scalar_lea.sflag [#allocation3], 1
    %16 = vsyncpa %s15, 0
    %17 = vsyncpa [#allocation6], 0
    %18 = vsyncpa [#allocation9], 0
    %19 = vsyncpa [#allocation12], 0
    %20 = vsyncpa [#allocation4], 0
    %s21 = scalar_lea.sflag [#allocation4], 1
    %22 = vsyncpa %s21, 0
    %23 = vsyncpa [#allocation15], 0
    %s24 = scalar_lea.sflag [#allocation15], 1
    %25 = vsyncpa %s24, 0
    loop: start=0, step=1, limit=4
    $region2: #{tpu_custom_call.1} parent=1 // loop_pre_header
      _
    $region3: #{tpu_custom_call.1} parent=1 // loop_header
      %s27 = sphi 0, %s31
      %p28 = scmp.ge.s32.totalorder %s27, 4
      %s34 = sphi 0, %s46
      %s35 = sphi 0, %s42
      %s36 = sphi 0, %s34
      %s37 = sphi 0, %s35
      %s38 = sphi 0, %s36
      %s39 = sphi 0, %s37
      %s51 = sphi 0, %s53
      %s54 = sphi 0, %s51
      %s55 = sphi 0, %s54
      %s71 = sphi 0, %s55
      %s75 = sphi 0, %s75
      %s77 = sphi 0, %s75
      %s78 = sphi 0, %s77
      %s92 = sphi 0, %s78
      %s96 = sphi 0, %s96
      %s98 = sphi 0, %s96
      %s99 = sphi 0, %s98
      %s113 = sphi 0, %s99
      %s117 = sphi 0, %s117
      %s119 = sphi 0, %s117
      %s120 = sphi 0, %s119
      %s134 = sphi 0, %s120
      %s138 = sphi 0, %s138
      %s140 = sphi 0, %s138
      %s141 = sphi 0, %s140
      %s155 = sphi 0, %s141
      %s159 = sphi 0, %s159
      %s161 = sphi 0, %s159
      %s162 = sphi 0, %s161
      %s176 = sphi 0, %s162
      %s184 = sphi 0, %s186
      %s187 = sphi 0, %s184
      %s188 = sphi 0, %s187
      %s204 = sphi 0, %s188
      %s212 = sphi 0, %s214
      %s215 = sphi 0, %s212
      %s216 = sphi 0, %s215
      %s232 = sphi 0, %s216
      %s240 = sphi 0, %s242
      %s243 = sphi 0, %s240
      %s244 = sphi 0, %s243
      %s260 = sphi 0, %s244
    $region4: #{tpu_custom_call.1} parent=1 // loop_header_branch
      %30 = sbr.rel (%p28) target = $region8
    $region5: #{tpu_custom_call.1} parent=1 // loop_body
      %s32 = ssub.s32 %s27, 1
      %s33 = ssub.s32 %s27, 2
      %s40 = sadd.s32 1, %s35
      %p41 = scmp.ge.s32.totalorder %s40, 1
      %s42 = scalar_select %p41, 0, %s40
      %s43 = sadd.s32 1, %s34
      %s44 = scalar_select %p41, %s43, %s34
      %p45 = scmp.ge.s32.totalorder %s44, 2
      %s46 = scalar_select %p45, 0, %s44
      %s47 = ssub.s32 %s34, %s46
      %s48 = ssub.s32 %s35, %s42
      %s49 = sor.u32 %s47, %s48
      %p50 = scmp.eq.s32.totalorder %s49, 0
      %s52 = sadd.s32 %s51, 1
      %s53 = scalar_select %p50, %s51, %s52
      %p56 = pneg %p50
      %p57 = scmp.eq.s32.totalorder %s27, 1
      %p58 = por %p56, %p57
      %p59 = scmp.ne.s32.totalorder %s51, %s54
      %p60 = scmp.eq.s32.totalorder %s27, 0
      %p61 = por %p59, %p60
      %p62 = scmp.ne.s32.totalorder %s51, %s54
      %p63 = scmp.eq.s32.totalorder %s32, 1
      %p64 = por %p62, %p63
      %p65 = scmp.ne.s32.totalorder %s54, %s55
      %p66 = scmp.eq.s32.totalorder %s32, 0
      %p67 = por %p65, %p66
      %p68 = scmp.ne.s32.totalorder %s54, %s55
      %p69 = scmp.eq.s32.totalorder %s33, 1
      %p70 = por %p68, %p69
      %p72 = scmp.ne.s32.totalorder %s55, %s71
      %p73 = scmp.eq.s32.totalorder %s33, 0
      %p74 = por %p72, %p73
      %s76 = sadd.s32 %s75, 1
      %p79 = scmp.eq.s32.totalorder %s27, 1
      %p80 = scmp.ne.s32.totalorder %s75, %s77
      %p81 = scmp.eq.s32.totalorder %s27, 0
      %p82 = por %p80, %p81
      %p83 = scmp.ne.s32.totalorder %s75, %s77
      %p84 = scmp.eq.s32.totalorder %s32, 1
      %p85 = por %p83, %p84
      %p86 = scmp.ne.s32.totalorder %s77, %s78
      %p87 = scmp.eq.s32.totalorder %s32, 0
      %p88 = por %p86, %p87
      %p89 = scmp.ne.s32.totalorder %s77, %s78
      %p90 = scmp.eq.s32.totalorder %s33, 1
      %p91 = por %p89, %p90
      %p93 = scmp.ne.s32.totalorder %s78, %s92
      %p94 = scmp.eq.s32.totalorder %s33, 0
      %p95 = por %p93, %p94
      %s97 = sadd.s32 %s96, 1
      %p100 = scmp.eq.s32.totalorder %s27, 1
      %p101 = scmp.ne.s32.totalorder %s96, %s98
      %p102 = scmp.eq.s32.totalorder %s27, 0
      %p103 = por %p101, %p102
      %p104 = scmp.ne.s32.totalorder %s96, %s98
      %p105 = scmp.eq.s32.totalorder %s32, 1
      %p106 = por %p104, %p105
      %p107 = scmp.ne.s32.totalorder %s98, %s99
      %p108 = scmp.eq.s32.totalorder %s32, 0
      %p109 = por %p107, %p108
      %p110 = scmp.ne.s32.totalorder %s98, %s99
      %p111 = scmp.eq.s32.totalorder %s33, 1
      %p112 = por %p110, %p111
      %p114 = scmp.ne.s32.totalorder %s99, %s113
      %p115 = scmp.eq.s32.totalorder %s33, 0
      %p116 = por %p114, %p115
      %s118 = sadd.s32 %s117, 1
      %p121 = scmp.eq.s32.totalorder %s27, 1
      %p122 = scmp.ne.s32.totalorder %s117, %s119
      %p123 = scmp.eq.s32.totalorder %s27, 0
      %p124 = por %p122, %p123
      %p125 = scmp.ne.s32.totalorder %s117, %s119
      %p126 = scmp.eq.s32.totalorder %s32, 1
      %p127 = por %p125, %p126
      %p128 = scmp.ne.s32.totalorder %s119, %s120
      %p129 = scmp.eq.s32.totalorder %s32, 0
      %p130 = por %p128, %p129
      %p131 = scmp.ne.s32.totalorder %s119, %s120
      %p132 = scmp.eq.s32.totalorder %s33, 1
      %p133 = por %p131, %p132
      %p135 = scmp.ne.s32.totalorder %s120, %s134
      %p136 = scmp.eq.s32.totalorder %s33, 0
      %p137 = por %p135, %p136
      %s139 = sadd.s32 %s138, 1
      %p142 = scmp.eq.s32.totalorder %s27, 1
      %p143 = scmp.ne.s32.totalorder %s138, %s140
      %p144 = scmp.eq.s32.totalorder %s27, 0
      %p145 = por %p143, %p144
      %p146 = scmp.ne.s32.totalorder %s138, %s140
      %p147 = scmp.eq.s32.totalorder %s32, 1
      %p148 = por %p146, %p147
      %p149 = scmp.ne.s32.totalorder %s140, %s141
      %p150 = scmp.eq.s32.totalorder %s32, 0
      %p151 = por %p149, %p150
      %p152 = scmp.ne.s32.totalorder %s140, %s141
      %p153 = scmp.eq.s32.totalorder %s33, 1
      %p154 = por %p152, %p153
      %p156 = scmp.ne.s32.totalorder %s141, %s155
      %p157 = scmp.eq.s32.totalorder %s33, 0
      %p158 = por %p156, %p157
      %s160 = sadd.s32 %s159, 1
      %p163 = scmp.eq.s32.totalorder %s27, 1
      %p164 = scmp.ne.s32.totalorder %s159, %s161
      %p165 = scmp.eq.s32.totalorder %s27, 0
      %p166 = por %p164, %p165
      %p167 = scmp.ne.s32.totalorder %s159, %s161
      %p168 = scmp.eq.s32.totalorder %s32, 1
      %p169 = por %p167, %p168
      %p170 = scmp.ne.s32.totalorder %s161, %s162
      %p171 = scmp.eq.s32.totalorder %s32, 0
      %p172 = por %p170, %p171
      %p173 = scmp.ne.s32.totalorder %s161, %s162
      %p174 = scmp.eq.s32.totalorder %s33, 1
      %p175 = por %p173, %p174
      %p177 = scmp.ne.s32.totalorder %s162, %s176
      %p178 = scmp.eq.s32.totalorder %s33, 0
      %p179 = por %p177, %p178
      %s180 = ssub.s32 %s34, %s46
      %s181 = ssub.s32 %s35, %s42
      %s182 = sor.u32 %s180, %s181
      %p183 = scmp.eq.s32.totalorder %s182, 0
      %s185 = sadd.s32 %s184, 1
      %s186 = scalar_select %p183, %s184, %s185
      %p189 = pneg %p183
      %p190 = scmp.eq.s32.totalorder %s27, 1
      %p191 = por %p189, %p190
      %p192 = scmp.ne.s32.totalorder %s184, %s187
      %p193 = scmp.eq.s32.totalorder %s27, 0
      %p194 = por %p192, %p193
      %p195 = scmp.ne.s32.totalorder %s184, %s187
      %p196 = scmp.eq.s32.totalorder %s32, 1
      %p197 = por %p195, %p196
      %p198 = scmp.ne.s32.totalorder %s187, %s188
      %p199 = scmp.eq.s32.totalorder %s32, 0
      %p200 = por %p198, %p199
      %p201 = scmp.ne.s32.totalorder %s187, %s188
      %p202 = scmp.eq.s32.totalorder %s33, 1
      %p203 = por %p201, %p202
      %p205 = scmp.ne.s32.totalorder %s188, %s204
      %p206 = scmp.eq.s32.totalorder %s33, 0
      %p207 = por %p205, %p206
      %s208 = ssub.s32 %s34, %s46
      %s209 = ssub.s32 %s35, %s42
      %s210 = sor.u32 %s208, %s209
      %p211 = scmp.eq.s32.totalorder %s210, 0
      %s213 = sadd.s32 %s212, 1
      %s214 = scalar_select %p211, %s212, %s213
      %p217 = pneg %p211
      %p218 = scmp.eq.s32.totalorder %s27, 1
      %p219 = por %p217, %p218
      %p220 = scmp.ne.s32.totalorder %s212, %s215
      %p221 = scmp.eq.s32.totalorder %s27, 0
      %p222 = por %p220, %p221
      %p223 = scmp.ne.s32.totalorder %s212, %s215
      %p224 = scmp.eq.s32.totalorder %s32, 1
      %p225 = por %p223, %p224
      %p226 = scmp.ne.s32.totalorder %s215, %s216
      %p227 = scmp.eq.s32.totalorder %s32, 0
      %p228 = por %p226, %p227
      %p229 = scmp.ne.s32.totalorder %s215, %s216
      %p230 = scmp.eq.s32.totalorder %s33, 1
      %p231 = por %p229, %p230
      %p233 = scmp.ne.s32.totalorder %s216, %s232
      %p234 = scmp.eq.s32.totalorder %s33, 0
      %p235 = por %p233, %p234
      %s236 = ssub.s32 %s34, %s46
      %s237 = ssub.s32 %s35, %s42
      %s238 = sor.u32 %s236, %s237
      %p239 = scmp.eq.s32.totalorder %s238, 0
      %s241 = sadd.s32 %s240, 1
      %s242 = scalar_select %p239, %s240, %s241
      %p245 = pneg %p239
      %p246 = scmp.eq.s32.totalorder %s27, 1
      %p247 = por %p245, %p246
      %p248 = scmp.ne.s32.totalorder %s240, %s243
      %p249 = scmp.eq.s32.totalorder %s27, 0
      %p250 = por %p248, %p249
      %p251 = scmp.ne.s32.totalorder %s240, %s243
      %p252 = scmp.eq.s32.totalorder %s32, 1
      %p253 = por %p251, %p252
      %p254 = scmp.ne.s32.totalorder %s243, %s244
      %p255 = scmp.eq.s32.totalorder %s32, 0
      %p256 = por %p254, %p255
      %p257 = scmp.ne.s32.totalorder %s243, %s244
      %p258 = scmp.eq.s32.totalorder %s33, 1
      %p259 = por %p257, %p258
      %p261 = scmp.ne.s32.totalorder %s244, %s260
      %p262 = scmp.eq.s32.totalorder %s33, 0
      %p263 = por %p261, %p262
      %p264 = scmp.le.s32.totalorder 1, %s27
      %p265 = scmp.lt.s32.totalorder %s27, 3
      %p266 = pnand %p264, %p265
      %p267 = pneg %p266
      // Predicated region
      $region9: #{tpu_custom_call.1} parent=5 // pred_check
        _
      $region10: #{tpu_custom_call.1} parent=5 // pred_check_branch
        %269 = sbr.rel (%p266) target = $region12
      $region11: #{tpu_custom_call.1} parent=5 // pred_region
        %s270 = ssub.s32 %s27, 1
        // Predicated region
        $region13: #{tpu_custom_call.1} parent=11 // pred_check
          %p271 = pneg %p88
        $region14: #{tpu_custom_call.1} parent=11 // pred_check_branch
          %273 = sbr.rel (%p271) target = $region16
        $region15: #{tpu_custom_call.1} parent=11 // pred_region
          %s275 = ssub.s32 16, 16
          %276 = vsyncadd [#allocation6], %s275
          %s278 = sshll.u32 [#allocation5], 4
          %s279 = int_to_ptr.vmem [resolvable:$true] %s278
          %281 = dma.hbm_to_vmem [thread:$0]  %s1, 16, %s279, [#allocation6]
        $region16: #{tpu_custom_call.1} parent=11 // pred_fallthru
          _
        // Predicated region
        $region17: #{tpu_custom_call.1} parent=11 // pred_check
          %p282 = pneg %p109
        $region18: #{tpu_custom_call.1} parent=11 // pred_check_branch
          %284 = sbr.rel (%p282) target = $region20
        $region19: #{tpu_custom_call.1} parent=11 // pred_region
          %s286 = ssub.s32 16, 16
          %287 = vsyncadd [#allocation6], %s286
          %s289 = sshll.u32 [#allocation7], 4
          %s290 = int_to_ptr.vmem [resolvable:$true] %s289
          %292 = dma.hbm_to_vmem [thread:$0]  %s2, 16, %s290, [#allocation6]
        $region20: #{tpu_custom_call.1} parent=11 // pred_fallthru
          _
        // Predicated region
        $region21: #{tpu_custom_call.1} parent=11 // pred_check
          %p293 = pneg %p130
        $region22: #{tpu_custom_call.1} parent=11 // pred_check_branch
          %295 = sbr.rel (%p293) target = $region24
        $region23: #{tpu_custom_call.1} parent=11 // pred_region
          %s297 = ssub.s32 512, 512
          %298 = vsyncadd [#allocation9], %s297
          %s299 = sshll.u32 [#allocation8], 4
          %s300 = int_to_ptr.vmem [resolvable:$true] %s299
          %305 = dma.hbm_to_vmem [thread:$0]  %s3, 512, %s300, [#allocation9], 128, 128, 8
        $region24: #{tpu_custom_call.1} parent=11 // pred_fallthru
          _
        // Predicated region
        $region25: #{tpu_custom_call.1} parent=11 // pred_check
          %p306 = pneg %p151
        $region26: #{tpu_custom_call.1} parent=11 // pred_check_branch
          %308 = sbr.rel (%p306) target = $region28
        $region27: #{tpu_custom_call.1} parent=11 // pred_region
          %s310 = ssub.s32 512, 512
          %311 = vsyncadd [#allocation9], %s310
          %s312 = sshll.u32 [#allocation10], 4
          %s313 = int_to_ptr.vmem [resolvable:$true] %s312
          %318 = dma.hbm_to_vmem [thread:$0]  %s4, 512, %s313, [#allocation9], 128, 128, 8
        $region28: #{tpu_custom_call.1} parent=11 // pred_fallthru
          _
        // Predicated region
        $region29: #{tpu_custom_call.1} parent=11 // pred_check
          %p319 = pneg %p172
        $region30: #{tpu_custom_call.1} parent=11 // pred_check_branch
          %321 = sbr.rel (%p319) target = $region32
        $region31: #{tpu_custom_call.1} parent=11 // pred_region
          %s323 = ssub.s32 512, 512
          %324 = vsyncadd [#allocation12], %s323
          %s325 = sshll.u32 [#allocation11], 4
          %s326 = int_to_ptr.vmem [resolvable:$true] %s325
          %331 = dma.hbm_to_vmem [thread:$0]  %s5, 512, %s326, [#allocation12], 128, 128, 8
        $region32: #{tpu_custom_call.1} parent=11 // pred_fallthru
          _
      $region12: #{tpu_custom_call.1} parent=5 // pred_fallthru
        _
      %p332 = scmp.lt.s32.totalorder %s27, 2
      // Predicated region
      $region33: #{tpu_custom_call.1} parent=5 // pred_check
        %p333 = pneg %p332
      $region34: #{tpu_custom_call.1} parent=5 // pred_check_branch
        %335 = sbr.rel (%p333) target = $region36
      $region35: #{tpu_custom_call.1} parent=5 // pred_region
        // Predicated region
        $region37: #{tpu_custom_call.1} parent=35 // pred_check
          %p336 = pneg %p61
        $region38: #{tpu_custom_call.1} parent=35 // pred_check_branch
          %338 = sbr.rel (%p336) target = $region40
        $region39: #{tpu_custom_call.1} parent=35 // pred_region
          %s339 = sand.u32 %s51, 1
          %s340 = scalar_lea.sflag [#allocation3], %s339
          %s341 = sand.u32 %s51, 1
          %s342 = smul.addr %s341, 8
          %s343 = scalar_lea.vmem [#allocation2], %s342
          %s345 = ssub.s32 128, 128
          %346 = vsyncadd %s340, %s345
          %s347 = sadd.s32 %s35, %s34
          %s348 = smul.addr %s347, 128
          %s349 = scalar_lea.hbm %s0, %s348
          %s351 = sshll.u32 %s343, 4
          %s352 = int_to_ptr.vmem [resolvable:$true] %s351
          %354 = dma.hbm_to_vmem [thread:$0]  %s349, 128, %s352, %s340
        $region40: #{tpu_custom_call.1} parent=35 // pred_fallthru
          _
      $region36: #{tpu_custom_call.1} parent=5 // pred_fallthru
        _
      %p355 = scmp.le.s32.totalorder 1, %s27
      %p356 = scmp.lt.s32.totalorder %s27, 3
      %p357 = pnand %p355, %p356
      %p358 = pneg %p357
      // Predicated region
      $region41: #{tpu_custom_call.1} parent=5 // pred_check
        _
      $region42: #{tpu_custom_call.1} parent=5 // pred_check_branch
        %360 = sbr.rel (%p357) target = $region44
      $region43: #{tpu_custom_call.1} parent=5 // pred_region
        %s361 = ssub.s32 %s27, 1
        %s362 = sand.u32 %s54, 1
        %s363 = scalar_lea.sflag [#allocation3], %s362
        %s364 = sand.u32 %s54, 1
        %s365 = smul.addr %s364, 8
        %s366 = scalar_lea.vmem [#allocation2], %s365
        // Predicated region
        $region45: #{tpu_custom_call.1} parent=43 // pred_check
          %p367 = pneg %p67
        $region46: #{tpu_custom_call.1} parent=43 // pred_check_branch
          %369 = sbr.rel (%p367) target = $region48
        $region47: #{tpu_custom_call.1} parent=43 // pred_region
          %370 = dma.done %s363, 128
        $region48: #{tpu_custom_call.1} parent=43 // pred_fallthru
          _
        // Predicated region
        $region49: #{tpu_custom_call.1} parent=43 // pred_check
          %p371 = pneg %p88
        $region50: #{tpu_custom_call.1} parent=43 // pred_check_branch
          %373 = sbr.rel (%p371) target = $region52
        $region51: #{tpu_custom_call.1} parent=43 // pred_region
          %374 = dma.done [#allocation6], 16
        $region52: #{tpu_custom_call.1} parent=43 // pred_fallthru
          _
        // Predicated region
        $region53: #{tpu_custom_call.1} parent=43 // pred_check
          %p375 = pneg %p109
        $region54: #{tpu_custom_call.1} parent=43 // pred_check_branch
          %377 = sbr.rel (%p375) target = $region56
        $region55: #{tpu_custom_call.1} parent=43 // pred_region
          %378 = dma.done [#allocation6], 16
        $region56: #{tpu_custom_call.1} parent=43 // pred_fallthru
          _
        // Predicated region
        $region57: #{tpu_custom_call.1} parent=43 // pred_check
          %p379 = pneg %p130
        $region58: #{tpu_custom_call.1} parent=43 // pred_check_branch
          %381 = sbr.rel (%p379) target = $region60
        $region59: #{tpu_custom_call.1} parent=43 // pred_region
          %382 = dma.done [#allocation9], 512
        $region60: #{tpu_custom_call.1} parent=43 // pred_fallthru
          _
        // Predicated region
        $region61: #{tpu_custom_call.1} parent=43 // pred_check
          %p383 = pneg %p151
        $region62: #{tpu_custom_call.1} parent=43 // pred_check_branch
          %385 = sbr.rel (%p383) target = $region64
        $region63: #{tpu_custom_call.1} parent=43 // pred_region
          %386 = dma.done [#allocation9], 512
        $region64: #{tpu_custom_call.1} parent=43 // pred_fallthru
          _
        // Predicated region
        $region65: #{tpu_custom_call.1} parent=43 // pred_check
          %p387 = pneg %p172
        $region66: #{tpu_custom_call.1} parent=43 // pred_check_branch
          %389 = sbr.rel (%p387) target = $region68
        $region67: #{tpu_custom_call.1} parent=43 // pred_region
          %390 = dma.done [#allocation12], 512
        $region68: #{tpu_custom_call.1} parent=43 // pred_fallthru
          _
        %s391 = sand.u32 %s54, 1
        %s392 = scalar_lea.sflag [#allocation3], %s391
        %s393 = sand.u32 %s54, 1
        %s394 = smul.addr %s393, 8
        %s395 = scalar_lea.vmem [#allocation2], %s394
        %p396 = pneg %p67
        %p397 = pneg %p64
        %p398 = pneg %p88
        %p399 = pneg %p85
        %p400 = pneg %p109
        %p401 = pneg %p106
        %p402 = pneg %p130
        %p403 = pneg %p127
        %p404 = pneg %p151
        %p405 = pneg %p148
        %p406 = pneg %p172
        %p407 = pneg %p169
        %p408 = pneg %p200
        %p409 = pneg %p197
        %s410 = sand.u32 %s187, 1
        %s411 = scalar_lea.sflag [#allocation4], %s410
        %s412 = sand.u32 %s187, 1
        %s413 = smul.addr %s412, 8
        %s414 = scalar_lea.vmem [#allocation13], %s413
        %p415 = pneg %p228
        %p416 = pneg %p225
        %s417 = sand.u32 %s32, 1
        %s418 = scalar_lea.sflag [#allocation15], %s417
        %s419 = sand.u32 %s215, 1
        %s420 = smul.addr %s419, 8
        %s421 = scalar_lea.vmem [#allocation14], %s420
        %p422 = pneg %p256
        %p423 = pneg %p253
        %s424 = sand.u32 %s32, 1
        %s425 = scalar_lea.sflag [#allocation15], %s424
        %s426 = sand.u32 %s243, 1
        %s427 = smul.addr %s426, 8
        %s428 = scalar_lea.vmem [#allocation16], %s427
        %v429 = vld [vmem:[%s366] sm:$0xff]
        %v430 = vld [vmem:[#allocation5] sm:$0x1]
        %v431 = vld [vmem:[#allocation7] sm:$0x1]
        %vm432 = vcmask 261120
        %v433 = vsel %vm432, %v429, 0.0
        %434 = vadd.xlane.f32.xlu0 %v433
        %v435 = vpop.xlane.xlu0 %434
        %v436 = vrcp.pop 32.0
        %v437 = vmul.f32 %v435, %v436
        %v438 = vsub.f32 %v429, %v437
        %v439 = vmul.f32 %v438, %v438
        %v440 = vsel %vm432, %v439, 0.0
        %441 = vadd.xlane.f32.xlu0 %v440
        %v442 = vpop.xlane.xlu0 %441
        %v443 = vmul.f32 %v442, %v436
        %v444 = vadd.f32 %v443, 1e-05
        %v445 = vrsqrt.pop %v444
        %v446 = vmul.f32 %v438, %v445
        %v448 = vlaneseq
        %v449 = vshrl.u32 %v448, 7
        %v450 = vsub.s32 0, %v449
        %v451 = vrot.slane %v430, %v450
        %v453 = vmul.f32 %v446, %v451
        %v455 = vlaneseq
        %v456 = vshrl.u32 %v455, 7
        %v457 = vsub.s32 0, %v456
        %v458 = vrot.slane %v431, %v457
        %v460 = vadd.f32 %v453, %v458
        %v461 = vld [vmem:[#allocation8] sm:$0xff]
        %v462 = vld [vmem:[#allocation8 + $0x8] sm:$0xff]
        %v463 = vld [vmem:[#allocation8 + $0x10] sm:$0xff]
        %v464 = vld [vmem:[#allocation8 + $0x18] sm:$0xff]
        %v466 = vsel %vm432, %v460, 0
        %468 = vmatprep.subr.mxu0 0.0
        %469 = vmatpush1.msra.mxu0 %v461
        %470 = vmatprep.subr.mxu0 0.0
        %471 = vmatpush1.msra.mxu0 %v462
        %472 = vmatprep.subr.mxu0 0.0
        %473 = vmatpush1.msra.mxu0 %v463
        %474 = vmatprep.subr.mxu0 0.0
        %475 = vmatpush1.msra.mxu0 %v464
        %476 = vmatprep.subr.mxu0 0.0
        %477 = vmatpush1.msra.mxu0 0.0
        %478 = vmatprep.subr.mxu0 0.0
        %479 = vmatpush1.msra.mxu0 0.0
        %480 = vmatprep.subr.mxu0 0.0
        %481 = vmatpush1.msra.mxu0 0.0
        %482 = vmatprep.subr.mxu0 0.0
        %483 = vmatpush1.msra.mxu0 0.0
        %484 = vmatprep.subr.mxu0 0.0
        %485 = vmatpush1.msra.mxu0 0.0
        %486 = vmatprep.subr.mxu0 0.0
        %487 = vmatpush1.msra.mxu0 0.0
        %488 = vmatprep.subr.mxu0 0.0
        %489 = vmatpush1.msra.mxu0 0.0
        %490 = vmatprep.subr.mxu0 0.0
        %491 = vmatpush1.msra.mxu0 0.0
        %492 = vmatprep.subr.mxu0 0.0
        %493 = vmatpush1.msra.mxu0 0.0
        %494 = vmatprep.subr.mxu0 0.0
        %495 = vmatpush1.msra.mxu0 0.0
        %496 = vmatprep.subr.mxu0 0.0
        %497 = vmatpush1.msra.mxu0 0.0
        %498 = vmatprep.subr.mxu0 0.0
        %499 = vmatpush1.msra.mxu0 0.0
        %500 = vmatprep.subr.mxu0 0.0
        %501 = vmatpush1.msra.mxu0 0.0
        %502 = vmatprep.subr.mxu0 0.0
        %503 = vmatpush1.msra.mxu0 0.0
        %504 = vmatprep.subr.mxu0 0.0
        %505 = vmatpush1.msra.mxu0 0.0
        %506 = vmatprep.subr.mxu0 0.0
        %507 = vmatpush1.msra.mxu0 0.0
        %508 = vmatprep.subr.mxu0 0.0
        %509 = vmatpush1.msra.mxu0 0.0
        %510 = vmatprep.subr.mxu0 0.0
        %511 = vmatpush1.msra.mxu0 0.0
        %512 = vmatprep.subr.mxu0 0.0
        %513 = vmatpush1.msra.mxu0 0.0
        %514 = vmatprep.subr.mxu0 0.0
        %515 = vmatpush1.msra.mxu0 0.0
        %516 = vmatprep.subr.mxu0 0.0
        %517 = vmatpush1.msra.mxu0 0.0
        %518 = vmatprep.subr.mxu0 0.0
        %519 = vmatpush1.msra.mxu0 0.0
        %520 = vmatprep.subr.mxu0 0.0
        %521 = vmatpush1.msra.mxu0 0.0
        %522 = vmatprep.subr.mxu0 0.0
        %523 = vmatpush1.msra.mxu0 0.0
        %524 = vmatprep.subr.mxu0 0.0
        %525 = vmatpush1.msra.mxu0 0.0
        %526 = vmatprep.subr.mxu0 0.0
        %527 = vmatpush1.msra.mxu0 0.0
        %528 = vmatprep.subr.mxu0 0.0
        %529 = vmatpush1.msra.mxu0 0.0
        %530 = vmatprep.subr.mxu0 0.0
        %531 = vmatpush1.msra.mxu0 0.0
        %532 = vmatprep.mubr.f32.mxu0 0.0
        %533 = vmatmul.mubr.f32.gmra.mrb[0].mxu0 %v466
        %v534 = vpop.f32.mrb[0].mxu0
        %v535 = vadd.f32 0.0, %v534
        %v536 = vpop.f32.mrb[0].mxu0
        %537 = vdwg.mxu0
        %538 = vst.msk [vmem:[%s414] sm:$0xff] %vm432, %v535
        %v539 = vld [vmem:[#allocation10] sm:$0xff]
        %v540 = vld [vmem:[#allocation10 + $0x8] sm:$0xff]
        %v541 = vld [vmem:[#allocation10 + $0x10] sm:$0xff]
        %v542 = vld [vmem:[#allocation10 + $0x18] sm:$0xff]
        %543 = vmatprep.subr.mxu0 0.0
        %544 = vmatpush1.msra.mxu0 %v539
        %545 = vmatprep.subr.mxu0 0.0
        %546 = vmatpush1.msra.mxu0 %v540
        %547 = vmatprep.subr.mxu0 0.0
        %548 = vmatpush1.msra.mxu0 %v541
        %549 = vmatprep.subr.mxu0 0.0
        %550 = vmatpush1.msra.mxu0 %v542
        %551 = vmatprep.subr.mxu0 0.0
        %552 = vmatpush1.msra.mxu0 0.0
        %553 = vmatprep.subr.mxu0 0.0
        %554 = vmatpush1.msra.mxu0 0.0
        %555 = vmatprep.subr.mxu0 0.0
        %556 = vmatpush1.msra.mxu0 0.0
        %557 = vmatprep.subr.mxu0 0.0
        %558 = vmatpush1.msra.mxu0 0.0
        %559 = vmatprep.subr.mxu0 0.0
        %560 = vmatpush1.msra.mxu0 0.0
        %561 = vmatprep.subr.mxu0 0.0
        %562 = vmatpush1.msra.mxu0 0.0
        %563 = vmatprep.subr.mxu0 0.0
        %564 = vmatpush1.msra.mxu0 0.0
        %565 = vmatprep.subr.mxu0 0.0
        %566 = vmatpush1.msra.mxu0 0.0
        %567 = vmatprep.subr.mxu0 0.0
        %568 = vmatpush1.msra.mxu0 0.0
        %569 = vmatprep.subr.mxu0 0.0
        %570 = vmatpush1.msra.mxu0 0.0
        %571 = vmatprep.subr.mxu0 0.0
        %572 = vmatpush1.msra.mxu0 0.0
        %573 = vmatprep.subr.mxu0 0.0
        %574 = vmatpush1.msra.mxu0 0.0
        %575 = vmatprep.subr.mxu0 0.0
        %576 = vmatpush1.msra.mxu0 0.0
        %577 = vmatprep.subr.mxu0 0.0
        %578 = vmatpush1.msra.mxu0 0.0
        %579 = vmatprep.subr.mxu0 0.0
        %580 = vmatpush1.msra.mxu0 0.0
        %581 = vmatprep.subr.mxu0 0.0
        %582 = vmatpush1.msra.mxu0 0.0
        %583 = vmatprep.subr.mxu0 0.0
        %584 = vmatpush1.msra.mxu0 0.0
        %585 = vmatprep.subr.mxu0 0.0
        %586 = vmatpush1.msra.mxu0 0.0
        %587 = vmatprep.subr.mxu0 0.0
        %588 = vmatpush1.msra.mxu0 0.0
        %589 = vmatprep.subr.mxu0 0.0
        %590 = vmatpush1.msra.mxu0 0.0
        %591 = vmatprep.subr.mxu0 0.0
        %592 = vmatpush1.msra.mxu0 0.0
        %593 = vmatprep.subr.mxu0 0.0
        %594 = vmatpush1.msra.mxu0 0.0
        %595 = vmatprep.subr.mxu0 0.0
        %596 = vmatpush1.msra.mxu0 0.0
        %597 = vmatprep.subr.mxu0 0.0
        %598 = vmatpush1.msra.mxu0 0.0
        %599 = vmatprep.subr.mxu0 0.0
        %600 = vmatpush1.msra.mxu0 0.0
        %601 = vmatprep.subr.mxu0 0.0
        %602 = vmatpush1.msra.mxu0 0.0
        %603 = vmatprep.subr.mxu0 0.0
        %604 = vmatpush1.msra.mxu0 0.0
        %605 = vmatprep.subr.mxu0 0.0
        %606 = vmatpush1.msra.mxu0 0.0
        %607 = vmatprep.mubr.f32.mxu0 0.0
        %608 = vmatmul.mubr.f32.gmra.mrb[0].mxu0 %v466
        %v609 = vpop.f32.mrb[0].mxu0
        %v610 = vadd.f32 0.0, %v609
        %v611 = vpop.f32.mrb[0].mxu0
        %612 = vdwg.mxu0
        %613 = vst.msk [vmem:[%s421] sm:$0xff] %vm432, %v610
        %v614 = vld [vmem:[#allocation11] sm:$0xff]
        %v615 = vld [vmem:[#allocation11 + $0x8] sm:$0xff]
        %v616 = vld [vmem:[#allocation11 + $0x10] sm:$0xff]
        %v617 = vld [vmem:[#allocation11 + $0x18] sm:$0xff]
        %618 = vmatprep.subr.mxu0 0.0
        %619 = vmatpush1.msra.mxu0 %v614
        %620 = vmatprep.subr.mxu0 0.0
        %621 = vmatpush1.msra.mxu0 %v615
        %622 = vmatprep.subr.mxu0 0.0
        %623 = vmatpush1.msra.mxu0 %v616
        %624 = vmatprep.subr.mxu0 0.0
        %625 = vmatpush1.msra.mxu0 %v617
        %626 = vmatprep.subr.mxu0 0.0
        %627 = vmatpush1.msra.mxu0 0.0
        %628 = vmatprep.subr.mxu0 0.0
        %629 = vmatpush1.msra.mxu0 0.0
        %630 = vmatprep.subr.mxu0 0.0
        %631 = vmatpush1.msra.mxu0 0.0
        %632 = vmatprep.subr.mxu0 0.0
        %633 = vmatpush1.msra.mxu0 0.0
        %634 = vmatprep.subr.mxu0 0.0
        %635 = vmatpush1.msra.mxu0 0.0
        %636 = vmatprep.subr.mxu0 0.0
        %637 = vmatpush1.msra.mxu0 0.0
        %638 = vmatprep.subr.mxu0 0.0
        %639 = vmatpush1.msra.mxu0 0.0
        %640 = vmatprep.subr.mxu0 0.0
        %641 = vmatpush1.msra.mxu0 0.0
        %642 = vmatprep.subr.mxu0 0.0
        %643 = vmatpush1.msra.mxu0 0.0
        %644 = vmatprep.subr.mxu0 0.0
        %645 = vmatpush1.msra.mxu0 0.0
        %646 = vmatprep.subr.mxu0 0.0
        %647 = vmatpush1.msra.mxu0 0.0
        %648 = vmatprep.subr.mxu0 0.0
        %649 = vmatpush1.msra.mxu0 0.0
        %650 = vmatprep.subr.mxu0 0.0
        %651 = vmatpush1.msra.mxu0 0.0
        %652 = vmatprep.subr.mxu0 0.0
        %653 = vmatpush1.msra.mxu0 0.0
        %654 = vmatprep.subr.mxu0 0.0
        %655 = vmatpush1.msra.mxu0 0.0
        %656 = vmatprep.subr.mxu0 0.0
        %657 = vmatpush1.msra.mxu0 0.0
        %658 = vmatprep.subr.mxu0 0.0
        %659 = vmatpush1.msra.mxu0 0.0
        %660 = vmatprep.subr.mxu0 0.0
        %661 = vmatpush1.msra.mxu0 0.0
        %662 = vmatprep.subr.mxu0 0.0
        %663 = vmatpush1.msra.mxu0 0.0
        %664 = vmatprep.subr.mxu0 0.0
        %665 = vmatpush1.msra.mxu0 0.0
        %666 = vmatprep.subr.mxu0 0.0
        %667 = vmatpush1.msra.mxu0 0.0
        %668 = vmatprep.subr.mxu0 0.0
        %669 = vmatpush1.msra.mxu0 0.0
        %670 = vmatprep.subr.mxu0 0.0
        %671 = vmatpush1.msra.mxu0 0.0
        %672 = vmatprep.subr.mxu0 0.0
        %673 = vmatpush1.msra.mxu0 0.0
        %674 = vmatprep.subr.mxu0 0.0
        %675 = vmatpush1.msra.mxu0 0.0
        %676 = vmatprep.subr.mxu0 0.0
        %677 = vmatpush1.msra.mxu0 0.0
        %678 = vmatprep.subr.mxu0 0.0
        %679 = vmatpush1.msra.mxu0 0.0
        %680 = vmatprep.subr.mxu0 0.0
        %681 = vmatpush1.msra.mxu0 0.0
        %682 = vmatprep.mubr.f32.mxu0 0.0
        %683 = vmatmul.mubr.f32.gmra.mrb[0].mxu0 %v466
        %v684 = vpop.f32.mrb[0].mxu0
        %v685 = vadd.f32 0.0, %v684
        %v686 = vpop.f32.mrb[0].mxu0
        %687 = vdwg.mxu0
        %688 = vst.msk [vmem:[%s428] sm:$0xff] %vm432, %v685
        %s689 = sand.u32 %s187, 1
        %s690 = scalar_lea.sflag [#allocation4], %s689
        %s691 = sand.u32 %s187, 1
        %s692 = smul.addr %s691, 8
        %s693 = scalar_lea.vmem [#allocation13], %s692
        %s694 = sand.u32 %s32, 1
        %s695 = scalar_lea.sflag [#allocation15], %s694
        %s696 = sand.u32 %s215, 1
        %s697 = smul.addr %s696, 8
        %s698 = scalar_lea.vmem [#allocation14], %s697
        %s699 = sand.u32 %s32, 1
        %s700 = scalar_lea.sflag [#allocation15], %s699
        %s701 = sand.u32 %s243, 1
        %s702 = smul.addr %s701, 8
        %s703 = scalar_lea.vmem [#allocation16], %s702
        // Predicated region
        $region69: #{tpu_custom_call.1} parent=43 // pred_check
          %p704 = pneg %p197
        $region70: #{tpu_custom_call.1} parent=43 // pred_check_branch
          %706 = sbr.rel (%p704) target = $region72
        $region71: #{tpu_custom_call.1} parent=43 // pred_region
          %s708 = ssub.s32 128, 128
          %709 = vsyncadd %s690, %s708
          %s710 = sadd.s32 %s37, %s36
          %s711 = smul.addr %s710, 128
          %s712 = scalar_lea.hbm %s6, %s711
          %s714 = sshll.u32 %s693, 4
          %s715 = int_to_ptr.vmem [resolvable:$true] %s714
          %717 = dma.vmem_to_hbm [thread:$0]  %s715, 128, %s712, %s690
        $region72: #{tpu_custom_call.1} parent=43 // pred_fallthru
          _
        // Predicated region
        $region73: #{tpu_custom_call.1} parent=43 // pred_check
          %p718 = pneg %p225
        $region74: #{tpu_custom_call.1} parent=43 // pred_check_branch
          %720 = sbr.rel (%p718) target = $region76
        $region75: #{tpu_custom_call.1} parent=43 // pred_region
          %s722 = ssub.s32 128, 128
          %723 = vsyncadd %s695, %s722
          %s724 = sadd.s32 %s37, %s36
          %s725 = smul.addr %s724, 128
          %s726 = scalar_lea.hbm %s7, %s725
          %s728 = sshll.u32 %s698, 4
          %s729 = int_to_ptr.vmem [resolvable:$true] %s728
          %731 = dma.vmem_to_hbm [thread:$0]  %s729, 128, %s726, %s695
        $region76: #{tpu_custom_call.1} parent=43 // pred_fallthru
          _
        // Predicated region
        $region77: #{tpu_custom_call.1} parent=43 // pred_check
          %p732 = pneg %p253
        $region78: #{tpu_custom_call.1} parent=43 // pred_check_branch
          %734 = sbr.rel (%p732) target = $region80
        $region79: #{tpu_custom_call.1} parent=43 // pred_region
          %s736 = ssub.s32 128, 128
          %737 = vsyncadd %s700, %s736
          %s738 = sadd.s32 %s37, %s36
          %s739 = smul.addr %s738, 128
          %s740 = scalar_lea.hbm %s8, %s739
          %s742 = sshll.u32 %s703, 4
          %s743 = int_to_ptr.vmem [resolvable:$true] %s742
          %745 = dma.vmem_to_hbm [thread:$0]  %s743, 128, %s740, %s700
        $region80: #{tpu_custom_call.1} parent=43 // pred_fallthru
          _
      $region44: #{tpu_custom_call.1} parent=5 // pred_fallthru
        _
      %p746 = scmp.le.s32.totalorder 2, %s27
      // Predicated region
      $region81: #{tpu_custom_call.1} parent=5 // pred_check
        %p747 = pneg %p746
      $region82: #{tpu_custom_call.1} parent=5 // pred_check_branch
        %749 = sbr.rel (%p747) target = $region84
      $region83: #{tpu_custom_call.1} parent=5 // pred_region
        %s750 = ssub.s32 %s27, 2
        // Predicated region
        $region85: #{tpu_custom_call.1} parent=83 // pred_check
          %p751 = pneg %p203
        $region86: #{tpu_custom_call.1} parent=83 // pred_check_branch
          %753 = sbr.rel (%p751) target = $region88
        $region87: #{tpu_custom_call.1} parent=83 // pred_region
          %s754 = sand.u32 %s188, 1
          %s755 = scalar_lea.sflag [#allocation4], %s754
          %s756 = sand.u32 %s188, 1
          %s757 = smul.addr %s756, 8
          %s758 = scalar_lea.vmem [#allocation13], %s757
          %759 = dma.done %s755, 128
        $region88: #{tpu_custom_call.1} parent=83 // pred_fallthru
          _
        // Predicated region
        $region89: #{tpu_custom_call.1} parent=83 // pred_check
          %p760 = pneg %p231
        $region90: #{tpu_custom_call.1} parent=83 // pred_check_branch
          %762 = sbr.rel (%p760) target = $region92
        $region91: #{tpu_custom_call.1} parent=83 // pred_region
          %s763 = sand.u32 %s33, 1
          %s764 = scalar_lea.sflag [#allocation15], %s763
          %s765 = sand.u32 %s216, 1
          %s766 = smul.addr %s765, 8
          %s767 = scalar_lea.vmem [#allocation14], %s766
          %768 = dma.done %s764, 128
        $region92: #{tpu_custom_call.1} parent=83 // pred_fallthru
          _
        // Predicated region
        $region93: #{tpu_custom_call.1} parent=83 // pred_check
          %p769 = pneg %p259
        $region94: #{tpu_custom_call.1} parent=83 // pred_check_branch
          %771 = sbr.rel (%p769) target = $region96
        $region95: #{tpu_custom_call.1} parent=83 // pred_region
          %s772 = sand.u32 %s33, 1
          %s773 = scalar_lea.sflag [#allocation15], %s772
          %s774 = sand.u32 %s244, 1
          %s775 = smul.addr %s774, 8
          %s776 = scalar_lea.vmem [#allocation16], %s775
          %777 = dma.done %s773, 128
        $region96: #{tpu_custom_call.1} parent=83 // pred_fallthru
          _
      $region84: #{tpu_custom_call.1} parent=5 // pred_fallthru
        _
    $region6: #{tpu_custom_call.1} parent=1 // loop_footer
      %s31 = sadd.s32 1, %s27
    $region7: #{tpu_custom_call.1} parent=1 // loop_footer_branch
      %26 = sbr.rel target = $region3
    $region8: #{tpu_custom_call.1} parent=1 // loop_exit
      _
    %778 = vsyncpa [#allocation3], 1
    %s779 = scalar_lea.sflag [#allocation3], 1
    %780 = vsyncpa %s779, 1
    %781 = vsyncpa [#allocation6], 1
    %782 = vsyncpa [#allocation9], 1
    %783 = vsyncpa [#allocation12], 1
    %784 = vsyncpa [#allocation4], 1
    %s785 = scalar_lea.sflag [#allocation4], 1
    %786 = vsyncpa %s785, 1
    %787 = vsyncpa [#allocation15], 1
    %s788 = scalar_lea.sflag [#allocation15], 1
    %789 = vsyncpa %s788, 1

</llo_original>
